<compile_context>
chip_gen: v7x
topology: tpu7x:2x2x1
jax: 0.10.0
libtpu: 0.0.40
codegen_flags: <defaults>
</compile_context>

<pallas_src>
import jax
import jax.numpy as jnp
from jax.experimental import pallas as pl
from jax.experimental.pallas import tpu as pltpu

IN_DIM = 16                      # input length (PyTorch (N, L) with C=1 squeezed)
C_OUT = 64                       # Conv1d output channels
K = 8                            # Conv1d kernel size
L_CONV = IN_DIM - K + 1          # 9
L_POOL = L_CONV // 2             # 4  (MaxPool1d(2) drops the trailing odd step)
FLAT = C_OUT * L_POOL            # 256 == int(64 * (IN_DIM - 8) / 2)
HID = 32
OUT = 2


def evcnn_kernel(x_ref, we_ref, wo_ref, bc_ref, w1_ref, b1_ref, w2_ref, b2_ref, o_ref):
    x = x_ref[...]                                                   # (TB, IN_DIM)
    # Conv at even / odd time steps as two aligned MXU matmuls.
    even = jnp.dot(x, we_ref[...], preferred_element_type=jnp.float32) + bc_ref[...]
    odd = jnp.dot(x, wo_ref[...], preferred_element_type=jnp.float32) + bc_ref[...]
    # relu(max(even, odd)) == max(relu(even), relu(odd)): fused ReLU + MaxPool1d(2).
    flat = jnp.maximum(jnp.maximum(even, odd), 0.0)                  # (TB, FLAT), order p*C_OUT+c
    # TODO(synk): Dropout(0.25)/Dropout(0.5) are identity at inference; not implemented.
    h = jnp.dot(flat, w1_ref[...], preferred_element_type=jnp.float32) + b1_ref[...]
    h = jnp.maximum(h, 0.0)                                          # (TB, HID)
    # Lane-dense output: contract w2 (OUT, HID) with h (TB, HID) on HID -> (OUT, TB).
    out = jax.lax.dot_general(w2_ref[...], h, (((1,), (1,)), ((), ())),
                              preferred_element_type=jnp.float32)
    o_ref[...] = out + b2_ref[...]                                   # b2 is (OUT, 1)


def _build_split_toeplitz(w_conv):
    """Even/odd Toeplitz conv weights: W[i, p*C_OUT + c] = w_conv[c, i - start_p]."""
    i = jnp.arange(IN_DIM)[:, None]                                  # (IN_DIM, 1)
    c = jnp.tile(jnp.arange(C_OUT), L_POOL)[None, :]                 # (1, FLAT)

    def build(starts):
        s = jnp.repeat(starts, C_OUT)[None, :]                       # (1, FLAT)
        k = i - s                                                    # (IN_DIM, FLAT)
        valid = (k >= 0) & (k < K)
        kc = jnp.clip(k, 0, K - 1)
        return jnp.where(valid, w_conv[c, kc], 0.0).astype(jnp.float32)

    p = jnp.arange(L_POOL)
    return build(2 * p), build(2 * p + 1)                            # each (IN_DIM, FLAT)


def evcnn_pallas(x, w_conv, b_conv, w1, b1, w2, b2):
    """x: (B, IN_DIM) float32.  Weights in PyTorch layout:
       w_conv (64, 1, 8) squeezed -> (64, 8), b_conv (64,),
       w1 (32, 256), b1 (32,), w2 (2, 32), b2 (2,)."""
    B = x.shape[0]

    # --- host-side parameter plumbing (pure layout, vectorized, no per-call loops) ---
    w_even, w_odd = _build_split_toeplitz(w_conv.astype(jnp.float32))
    bc = jnp.tile(b_conv.astype(jnp.float32), (L_POOL,)).reshape(1, FLAT)
    # PyTorch flatten order is c*L_POOL + p; kernel produces p*C_OUT + c -> permute W1 cols.
    w1p = jnp.transpose(w1.reshape(HID, C_OUT, L_POOL), (2, 1, 0)).reshape(FLAT, HID)
    w1p = w1p.astype(jnp.float32)
    b1p = b1.reshape(1, HID).astype(jnp.float32)
    w2p = w2.astype(jnp.float32)                                     # (OUT, HID), used via dot_general
    b2p = b2.reshape(OUT, 1).astype(jnp.float32)

    # --- batch tiling: TB rows per grid step, padded to a multiple of TB ---
    TB = min(512, pl.cdiv(B, 128) * 128)
    B_pad = pl.cdiv(B, TB) * TB
    xp = x.astype(jnp.float32)
    if B_pad != B:
        xp = jnp.pad(xp, ((0, B_pad - B), (0, 0)))

    def const_spec(shape):
        return pl.BlockSpec(shape, lambda i: (0, 0))

    out = pl.pallas_call(
        evcnn_kernel,
        out_shape=jax.ShapeDtypeStruct((OUT, B_pad), jnp.float32),
        grid=(B_pad // TB,),
        in_specs=[
            pl.BlockSpec((TB, IN_DIM), lambda i: (i, 0)),            # x tile (pipelined)
            const_spec((IN_DIM, FLAT)),                              # W_even (resident)
            const_spec((IN_DIM, FLAT)),                              # W_odd
            const_spec((1, FLAT)),                                   # conv bias
            const_spec((FLAT, HID)),                                 # fc1 weight
            const_spec((1, HID)),                                    # fc1 bias
            const_spec((OUT, HID)),                                  # fc2 weight
            const_spec((OUT, 1)),                                    # fc2 bias
        ],
        out_specs=pl.BlockSpec((OUT, TB), lambda i: (0, i)),         # lane-dense output
        compiler_params=pltpu.CompilerParams(
            dimension_semantics=("parallel",)),
    )(xp, w_even, w_odd, bc, w1p, b1p, w2p, b2p)

    return out[:, :B].T                                              # (B, OUT)


def evcnn_reference(x, w_conv, b_conv, w1, b1, w2, b2):
    """Plain-JAX replica of the PyTorch forward (eval mode) for verification."""
    B = x.shape[0]
    # Conv1d: conv[:, c, t] = sum_k x[:, t+k] * w_conv[c, k] + b_conv[c]
    conv = jnp.stack([x[:, t:t + K] @ w_conv.T for t in range(L_CONV)], axis=2)  # (B, 64, 9)
    conv = conv + b_conv[None, :, None]
    conv = jnp.maximum(conv, 0.0)
    pooled = jnp.max(conv[:, :, :2 * L_POOL].reshape(B, C_OUT, L_POOL, 2), axis=-1)  # (B, 64, 4)
    flat = pooled.reshape(B, FLAT)                                   # order c*L_POOL + p
    h = jnp.maximum(flat @ w1.T + b1, 0.0)
    return h @ w2.T + b2


if __name__ == "__main__":
    key = jax.random.PRNGKey(0)
    kx, k1, k2, k3, k4, k5, k6 = jax.random.split(key, 7)

    B = 2
    x = jax.random.normal(kx, (B, IN_DIM), jnp.float32)

    # Deterministic synthetic parameters (PyTorch shapes, Conv1d weight squeezed over C_in=1).
    w_conv = 0.2 * jax.random.normal(k1, (C_OUT, K), jnp.float32)
    b_conv = 0.1 * jax.random.normal(k2, (C_OUT,), jnp.float32)
    w1 = 0.05 * jax.random.normal(k3, (HID, FLAT), jnp.float32)
    b1 = 0.1 * jax.random.normal(k4, (HID,), jnp.float32)
    w2 = 0.1 * jax.random.normal(k5, (OUT, HID), jnp.float32)
    b2 = 0.1 * jax.random.normal(k6, (OUT,), jnp.float32)

    out = evcnn_pallas(x, w_conv, b_conv, w1, b1, w2, b2)
    out = jax.block_until_ready(out)

    ref = evcnn_reference(x, w_conv, b_conv, w1, b1, w2, b2)
    assert out.shape == (B, OUT)
    assert jnp.allclose(out, ref, atol=1e-4, rtol=1e-4), (out, ref)

    print("KERNEL_OK")
</pallas_src>

<mosaic_0001>
module attributes {stable_mosaic.version = 11 : i64} {
  func.func @evcnn_kernel(%arg0: i32, %arg1: memref<128x16xf32, #tpu.memory_space<vmem>>, %arg2: memref<16x256xf32, #tpu.memory_space<vmem>>, %arg3: memref<16x256xf32, #tpu.memory_space<vmem>>, %arg4: memref<1x256xf32, #tpu.memory_space<vmem>>, %arg5: memref<256x32xf32, #tpu.memory_space<vmem>>, %arg6: memref<1x32xf32, #tpu.memory_space<vmem>>, %arg7: memref<2x32xf32, #tpu.memory_space<vmem>>, %arg8: memref<2x1xf32, #tpu.memory_space<vmem>>, %arg9: memref<2x128xf32, #tpu.memory_space<vmem>>) attributes {dimension_semantics = [#tpu.dimension_semantics<parallel>], iteration_bounds = array<i64: 1>, scalar_prefetch = 0 : i64, scratch_operands = 0 : i64, tpu.core_type = #tpu.core_type<tc>, window_params = [{transform_indices = @transform_0, window_bounds = array<i64: 128, 16>}, {pipeline_mode = #tpu.pipeline_mode<synchronous>, transform_indices = @transform_1, window_bounds = array<i64: 16, 256>}, {pipeline_mode = #tpu.pipeline_mode<synchronous>, transform_indices = @transform_2, window_bounds = array<i64: 16, 256>}, {pipeline_mode = #tpu.pipeline_mode<synchronous>, transform_indices = @transform_3, window_bounds = array<i64: 1, 256>}, {pipeline_mode = #tpu.pipeline_mode<synchronous>, transform_indices = @transform_4, window_bounds = array<i64: 256, 32>}, {pipeline_mode = #tpu.pipeline_mode<synchronous>, transform_indices = @transform_5, window_bounds = array<i64: 1, 32>}, {pipeline_mode = #tpu.pipeline_mode<synchronous>, transform_indices = @transform_6, window_bounds = array<i64: 2, 32>}, {pipeline_mode = #tpu.pipeline_mode<synchronous>, transform_indices = @transform_7, window_bounds = array<i64: 2, 1>}, {transform_indices = @transform_8, window_bounds = array<i64: 2, 128>}]} {
    %c0 = arith.constant 0 : index
    %c0_0 = arith.constant 0 : index
    %0 = vector.load %arg1[%c0, %c0_0] : memref<128x16xf32, #tpu.memory_space<vmem>>, vector<128x16xf32>
    %c0_1 = arith.constant 0 : index
    %c0_2 = arith.constant 0 : index
    %1 = vector.load %arg2[%c0_1, %c0_2] : memref<16x256xf32, #tpu.memory_space<vmem>>, vector<16x256xf32>
    %cst = arith.constant dense<0.000000e+00> : vector<128x256xf32>
    %2 = tpu.matmul %0, %1, %cst {dimension_numbers = #tpu.dot_dimension_numbers<[1], [0], [0], [1], [0, 0, 1, 1], [], []>} : vector<128x16xf32>, vector<16x256xf32>, vector<128x256xf32> -> vector<128x256xf32>
    %c0_3 = arith.constant 0 : index
    %c0_4 = arith.constant 0 : index
    %3 = vector.load %arg4[%c0_3, %c0_4] : memref<1x256xf32, #tpu.memory_space<vmem>>, vector<1x256xf32>
    %4 = vector.broadcast %3 : vector<1x256xf32> to vector<128x256xf32>
    %5 = arith.addf %2, %4 : vector<128x256xf32>
    %c0_5 = arith.constant 0 : index
    %c0_6 = arith.constant 0 : index
    %6 = vector.load %arg3[%c0_5, %c0_6] : memref<16x256xf32, #tpu.memory_space<vmem>>, vector<16x256xf32>
    %cst_7 = arith.constant dense<0.000000e+00> : vector<128x256xf32>
    %7 = tpu.matmul %0, %6, %cst_7 {dimension_numbers = #tpu.dot_dimension_numbers<[1], [0], [0], [1], [0, 0, 1, 1], [], []>} : vector<128x16xf32>, vector<16x256xf32>, vector<128x256xf32> -> vector<128x256xf32>
    %c0_8 = arith.constant 0 : index
    %c0_9 = arith.constant 0 : index
    %8 = vector.load %arg4[%c0_8, %c0_9] : memref<1x256xf32, #tpu.memory_space<vmem>>, vector<1x256xf32>
    %9 = vector.broadcast %8 : vector<1x256xf32> to vector<128x256xf32>
    %10 = arith.addf %7, %9 : vector<128x256xf32>
    %11 = arith.maximumf %5, %10 : vector<128x256xf32>
    %cst_10 = arith.constant 0.000000e+00 : f32
    %12 = vector.broadcast %cst_10 : f32 to vector<128x256xf32>
    %13 = arith.maximumf %11, %12 : vector<128x256xf32>
    %c0_11 = arith.constant 0 : index
    %c0_12 = arith.constant 0 : index
    %14 = vector.load %arg5[%c0_11, %c0_12] : memref<256x32xf32, #tpu.memory_space<vmem>>, vector<256x32xf32>
    %cst_13 = arith.constant dense<0.000000e+00> : vector<128x32xf32>
    %15 = tpu.matmul %13, %14, %cst_13 {dimension_numbers = #tpu.dot_dimension_numbers<[1], [0], [0], [1], [0, 0, 1, 1], [], []>} : vector<128x256xf32>, vector<256x32xf32>, vector<128x32xf32> -> vector<128x32xf32>
    %c0_14 = arith.constant 0 : index
    %c0_15 = arith.constant 0 : index
    %16 = vector.load %arg6[%c0_14, %c0_15] : memref<1x32xf32, #tpu.memory_space<vmem>>, vector<1x32xf32>
    %17 = vector.broadcast %16 : vector<1x32xf32> to vector<128x32xf32>
    %18 = arith.addf %15, %17 : vector<128x32xf32>
    %cst_16 = arith.constant 0.000000e+00 : f32
    %19 = vector.broadcast %cst_16 : f32 to vector<128x32xf32>
    %20 = arith.maximumf %18, %19 : vector<128x32xf32>
    %c0_17 = arith.constant 0 : index
    %c0_18 = arith.constant 0 : index
    %21 = vector.load %arg7[%c0_17, %c0_18] : memref<2x32xf32, #tpu.memory_space<vmem>>, vector<2x32xf32>
    %cst_19 = arith.constant dense<0.000000e+00> : vector<2x128xf32>
    %22 = tpu.matmul %21, %20, %cst_19 {dimension_numbers = #tpu.dot_dimension_numbers<[1], [1], [0], [0], [0, 0, 1, 0], [], []>} : vector<2x32xf32>, vector<128x32xf32>, vector<2x128xf32> -> vector<2x128xf32>
    %c0_20 = arith.constant 0 : index
    %c0_21 = arith.constant 0 : index
    %23 = vector.load %arg8[%c0_20, %c0_21] : memref<2x1xf32, #tpu.memory_space<vmem>>, vector<2x1xf32>
    %24 = vector.broadcast %23 : vector<2x1xf32> to vector<2x128xf32>
    %25 = arith.addf %22, %24 : vector<2x128xf32>
    %c0_22 = arith.constant 0 : index
    %c0_23 = arith.constant 0 : index
    %26 = vector.load %arg9[%c0_22, %c0_23] : memref<2x128xf32, #tpu.memory_space<vmem>>, vector<2x128xf32>
    tpu.vector_store %arg9[%c0_22, %c0_23], %25 {strides = array<i32>} : memref<2x128xf32, #tpu.memory_space<vmem>>, vector<2x128xf32>,
    return
  }
  func.func @transform_0(%arg0: i32) -> (i32, i32) {
    %c0_i32 = arith.constant 0 : i32
    %c0_i32_0 = arith.constant 0 : i32
    return %arg0, %c0_i32 : i32, i32
  }
  func.func @transform_1(%arg0: i32) -> (i32, i32) {
    %c0_i32 = arith.constant 0 : i32
    %c0_i32_0 = arith.constant 0 : i32
    %c0_i32_1 = arith.constant 0 : i32
    return %c0_i32, %c0_i32_0 : i32, i32
  }
  func.func @transform_2(%arg0: i32) -> (i32, i32) {
    %c0_i32 = arith.constant 0 : i32
    %c0_i32_0 = arith.constant 0 : i32
    %c0_i32_1 = arith.constant 0 : i32
    return %c0_i32, %c0_i32_0 : i32, i32
  }
  func.func @transform_3(%arg0: i32) -> (i32, i32) {
    %c0_i32 = arith.constant 0 : i32
    %c0_i32_0 = arith.constant 0 : i32
    %c0_i32_1 = arith.constant 0 : i32
    return %c0_i32, %c0_i32_0 : i32, i32
  }
  func.func @transform_4(%arg0: i32) -> (i32, i32) {
    %c0_i32 = arith.constant 0 : i32
    %c0_i32_0 = arith.constant 0 : i32
    %c0_i32_1 = arith.constant 0 : i32
    return %c0_i32, %c0_i32_0 : i32, i32
  }
  func.func @transform_5(%arg0: i32) -> (i32, i32) {
    %c0_i32 = arith.constant 0 : i32
    %c0_i32_0 = arith.constant 0 : i32
    %c0_i32_1 = arith.constant 0 : i32
    return %c0_i32, %c0_i32_0 : i32, i32
  }
  func.func @transform_6(%arg0: i32) -> (i32, i32) {
    %c0_i32 = arith.constant 0 : i32
    %c0_i32_0 = arith.constant 0 : i32
    %c0_i32_1 = arith.constant 0 : i32
    return %c0_i32, %c0_i32_0 : i32, i32
  }
  func.func @transform_7(%arg0: i32) -> (i32, i32) {
    %c0_i32 = arith.constant 0 : i32
    %c0_i32_0 = arith.constant 0 : i32
    %c0_i32_1 = arith.constant 0 : i32
    return %c0_i32, %c0_i32_0 : i32, i32
  }
  func.func @transform_8(%arg0: i32) -> (i32, i32) {
    %c0_i32 = arith.constant 0 : i32
    %c0_i32_0 = arith.constant 0 : i32
    return %c0_i32, %arg0 : i32, i32
  }
}

</mosaic_0001>

<llo_original>
// kernel: tpu_custom_call.1
$region0: #{tpu_custom_call.1}
  #allocation0 [shape = 'u32[]', space=smem, size = 0x4, offset = 0x4, fixed_abs, tag = 'smem constant byte address 0x4 - core index']
  #allocation1 [shape = 'u32[144,128]{1,0:T(1,128)}', space=vmem, size = 0x12000, scoped, tag = 'internal scratch']
  %s0 = inlined_call_operand.vmem [shape: f32[128,16], index: 0, kind: input, shape index: {}]
  %s1 = inlined_call_operand.vmem [shape: f32[16,256], index: 1, kind: input, shape index: {}]
  %s2 = inlined_call_operand.vmem [shape: f32[16,256], index: 2, kind: input, shape index: {}]
  %s3 = inlined_call_operand.vmem [shape: f32[1,256], index: 3, kind: input, shape index: {}]
  %s4 = inlined_call_operand.vmem [shape: f32[256,32], index: 4, kind: input, shape index: {}]
  %s5 = inlined_call_operand.vmem [shape: f32[1,32], index: 5, kind: input, shape index: {}]
  %s6 = inlined_call_operand.vmem [shape: f32[2,32], index: 6, kind: input, shape index: {}]
  %s7 = inlined_call_operand.vmem [shape: f32[2,1], index: 7, kind: input, shape index: {}]
  %s8 = inlined_call_operand.hbm [shape: f32[2,128], index: 8, kind: output, shape index: {}]
  %s9 = sld [smem:[#allocation0]]
  $region42: #{tpu_custom_call.1} parent=0
    _
  %s11 = ssub.s32 1, %s9
  %s12 = scalar_select 0, %s11, %s9
  $region1: #{tpu_custom_call.1} parent=0
    #allocation2 [shape = 'u8[1024]{0}', space=vmem, size = 0x400, scoped, tag = 'output window, operand 0, single buffered']
    #allocation3 [shape = 's32[1]{0}', space=sflag, size = 0x4, scoped, tag = 'scoped memory for tpu_custom_call.1']
    %13 = vsyncpa [#allocation3], 0
    // Predicated region
    $region2: #{tpu_custom_call.1} parent=1 // pred_check
      _
    $region3: #{tpu_custom_call.1} parent=1 // pred_check_branch
      %15 = sbr.rel (0) target = $region5
    $region4: #{tpu_custom_call.1} parent=1 // pred_region
      _
    $region5: #{tpu_custom_call.1} parent=1 // pred_fallthru
      _
    // Predicated region
    $region6: #{tpu_custom_call.1} parent=1 // pred_check
      _
    $region7: #{tpu_custom_call.1} parent=1 // pred_check_branch
      %17 = sbr.rel (0) target = $region9
    $region8: #{tpu_custom_call.1} parent=1 // pred_region
      _
    $region9: #{tpu_custom_call.1} parent=1 // pred_fallthru
      _
    // Predicated region
    $region10: #{tpu_custom_call.1} parent=1 // pred_check
      _
    $region11: #{tpu_custom_call.1} parent=1 // pred_check_branch
      %19 = sbr.rel (0) target = $region13
    $region12: #{tpu_custom_call.1} parent=1 // pred_region
      _
    $region13: #{tpu_custom_call.1} parent=1 // pred_fallthru
      _
    // Predicated region
    $region14: #{tpu_custom_call.1} parent=1 // pred_check
      _
    $region15: #{tpu_custom_call.1} parent=1 // pred_check_branch
      %21 = sbr.rel (0) target = $region17
    $region16: #{tpu_custom_call.1} parent=1 // pred_region
      _
    $region17: #{tpu_custom_call.1} parent=1 // pred_fallthru
      _
    // Predicated region
    $region18: #{tpu_custom_call.1} parent=1 // pred_check
      _
    $region19: #{tpu_custom_call.1} parent=1 // pred_check_branch
      %23 = sbr.rel (0) target = $region21
    $region20: #{tpu_custom_call.1} parent=1 // pred_region
      _
    $region21: #{tpu_custom_call.1} parent=1 // pred_fallthru
      _
    // Predicated region
    $region22: #{tpu_custom_call.1} parent=1 // pred_check
      _
    $region23: #{tpu_custom_call.1} parent=1 // pred_check_branch
      %25 = sbr.rel (0) target = $region25
    $region24: #{tpu_custom_call.1} parent=1 // pred_region
      _
    $region25: #{tpu_custom_call.1} parent=1 // pred_fallthru
      _
    // Predicated region
    $region26: #{tpu_custom_call.1} parent=1 // pred_check
      _
    $region27: #{tpu_custom_call.1} parent=1 // pred_check_branch
      %27 = sbr.rel (0) target = $region29
    $region28: #{tpu_custom_call.1} parent=1 // pred_region
      _
    $region29: #{tpu_custom_call.1} parent=1 // pred_fallthru
      _
    // Predicated region
    $region30: #{tpu_custom_call.1} parent=1 // pred_check
      _
    $region31: #{tpu_custom_call.1} parent=1 // pred_check_branch
      %29 = sbr.rel (0) target = $region33
    $region32: #{tpu_custom_call.1} parent=1 // pred_region
      _
    $region33: #{tpu_custom_call.1} parent=1 // pred_fallthru
      _
    %v30 = vld [vmem:[%s0] sm:$0xff]
    %v31 = vld [vmem:[%s0 + $0x8] sm:$0xff]
    %v32 = vld [vmem:[%s0 + $0x10] sm:$0xff]
    %v33 = vld [vmem:[%s0 + $0x18] sm:$0xff]
    %v34 = vld [vmem:[%s0 + $0x20] sm:$0xff]
    %v35 = vld [vmem:[%s0 + $0x28] sm:$0xff]
    %v36 = vld [vmem:[%s0 + $0x30] sm:$0xff]
    %v37 = vld [vmem:[%s0 + $0x38] sm:$0xff]
    %v38 = vld [vmem:[%s0 + $0x40] sm:$0xff]
    %v39 = vld [vmem:[%s0 + $0x48] sm:$0xff]
    %v40 = vld [vmem:[%s0 + $0x50] sm:$0xff]
    %v41 = vld [vmem:[%s0 + $0x58] sm:$0xff]
    %v42 = vld [vmem:[%s0 + $0x60] sm:$0xff]
    %v43 = vld [vmem:[%s0 + $0x68] sm:$0xff]
    %v44 = vld [vmem:[%s0 + $0x70] sm:$0xff]
    %v45 = vld [vmem:[%s0 + $0x78] sm:$0xff]
    %v46 = vld [vmem:[%s1] sm:$0xff]
    %v47 = vld [vmem:[%s1 + $0x8] sm:$0xff]
    %v48 = vld [vmem:[%s1 + $0x10] sm:$0xff]
    %v49 = vld [vmem:[%s1 + $0x18] sm:$0xff]
    %v50 = vld [vmem:[%s3] sm:$0x3]
    %v52 = vlaneseq
    %v53 = vshrl.u32 %v52, 7
    %v54 = vsub.s32 0, %v53
    %v55 = vrot.slane %v50, %v54
    %v56 = vlaneseq
    %v57 = vshrl.u32 %v56, 7
    %v58 = vsub.s32 1, %v57
    %v59 = vrot.slane %v50, %v58
    %vm62 = vcmask 130048
    %v64 = vsel %vm62, %v30, 0
    %v67 = vsel %vm62, %v31, 0
    %v70 = vsel %vm62, %v32, 0
    %v73 = vsel %vm62, %v33, 0
    %v76 = vsel %vm62, %v34, 0
    %v79 = vsel %vm62, %v35, 0
    %v82 = vsel %vm62, %v36, 0
    %v85 = vsel %vm62, %v37, 0
    %v88 = vsel %vm62, %v38, 0
    %v91 = vsel %vm62, %v39, 0
    %v94 = vsel %vm62, %v40, 0
    %v97 = vsel %vm62, %v41, 0
    %v100 = vsel %vm62, %v42, 0
    %v103 = vsel %vm62, %v43, 0
    %v106 = vsel %vm62, %v44, 0
    %v109 = vsel %vm62, %v45, 0
    %111 = vmatprep.subr.mxu0 %v47
    %112 = vmatpush1.msra.mxu0 %v46
    %113 = vmatprep.subr.mxu0 %v49
    %114 = vmatpush1.msra.mxu0 %v48
    %115 = vmatprep.subr.mxu0 0.0
    %116 = vmatpush1.msra.mxu0 0.0
    %117 = vmatprep.subr.mxu0 0.0
    %118 = vmatpush1.msra.mxu0 0.0
    %119 = vmatprep.subr.mxu0 0.0
    %120 = vmatpush1.msra.mxu0 0.0
    %121 = vmatprep.subr.mxu0 0.0
    %122 = vmatpush1.msra.mxu0 0.0
    %123 = vmatprep.subr.mxu0 0.0
    %124 = vmatpush1.msra.mxu0 0.0
    %125 = vmatprep.subr.mxu0 0.0
    %126 = vmatpush1.msra.mxu0 0.0
    %127 = vmatprep.subr.mxu0 0.0
    %128 = vmatpush1.msra.mxu0 0.0
    %129 = vmatprep.subr.mxu0 0.0
    %130 = vmatpush1.msra.mxu0 0.0
    %131 = vmatprep.subr.mxu0 0.0
    %132 = vmatpush1.msra.mxu0 0.0
    %133 = vmatprep.subr.mxu0 0.0
    %134 = vmatpush1.msra.mxu0 0.0
    %135 = vmatprep.subr.mxu0 0.0
    %136 = vmatpush1.msra.mxu0 0.0
    %137 = vmatprep.subr.mxu0 0.0
    %138 = vmatpush1.msra.mxu0 0.0
    %139 = vmatprep.subr.mxu0 0.0
    %140 = vmatpush1.msra.mxu0 0.0
    %141 = vmatprep.subr.mxu0 0.0
    %142 = vmatpush1.msra.mxu0 0.0
    %143 = vmatprep.subr.mxu0 0.0
    %144 = vmatpush1.msra.mxu0 0.0
    %145 = vmatprep.subr.mxu0 0.0
    %146 = vmatpush1.msra.mxu0 0.0
    %147 = vmatprep.subr.mxu0 0.0
    %148 = vmatpush1.msra.mxu0 0.0
    %149 = vmatprep.subr.mxu0 0.0
    %150 = vmatpush1.msra.mxu0 0.0
    %151 = vmatprep.subr.mxu0 0.0
    %152 = vmatpush1.msra.mxu0 0.0
    %153 = vmatprep.subr.mxu0 0.0
    %154 = vmatpush1.msra.mxu0 0.0
    %155 = vmatprep.subr.mxu0 0.0
    %156 = vmatpush1.msra.mxu0 0.0
    %157 = vmatprep.subr.mxu0 0.0
    %158 = vmatpush1.msra.mxu0 0.0
    %159 = vmatprep.subr.mxu0 0.0
    %160 = vmatpush1.msra.mxu0 0.0
    %161 = vmatprep.subr.mxu0 0.0
    %162 = vmatpush1.msra.mxu0 0.0
    %163 = vmatprep.subr.mxu0 0.0
    %164 = vmatpush1.msra.mxu0 0.0
    %165 = vmatprep.subr.mxu0 0.0
    %166 = vmatpush1.msra.mxu0 0.0
    %167 = vmatprep.subr.mxu0 0.0
    %168 = vmatpush1.msra.mxu0 0.0
    %169 = vmatprep.subr.mxu0 0.0
    %170 = vmatpush1.msra.mxu0 0.0
    %171 = vmatprep.subr.mxu0 0.0
    %172 = vmatpush1.msra.mxu0 0.0
    %173 = vmatprep.subr.mxu0 0.0
    %174 = vmatpush1.msra.mxu0 0.0
    %175 = vmatprep.mubr.f32.mxu0 0.0
    %176 = vmatmul.mubr.f32.gmra.mrb[0].mxu0 %v64
    %v177 = vpop.f32.mrb[0].mxu0
    %v178 = vadd.f32 %v55, %v177
    %v179 = vpop.f32.mrb[0].mxu0
    %v180 = vadd.f32 %v59, %v179
    %181 = vmatprep.mubr.f32.mxu0 0.0
    %182 = vmatmul.mubr.f32.gmra.mrb[0].mxu0 %v67
    %v183 = vpop.f32.mrb[0].mxu0
    %v184 = vadd.f32 %v55, %v183
    %v185 = vpop.f32.mrb[0].mxu0
    %v186 = vadd.f32 %v59, %v185
    %187 = vmatprep.mubr.f32.mxu0 0.0
    %188 = vmatmul.mubr.f32.gmra.mrb[0].mxu0 %v70
    %v189 = vpop.f32.mrb[0].mxu0
    %v190 = vadd.f32 %v55, %v189
    %v191 = vpop.f32.mrb[0].mxu0
    %v192 = vadd.f32 %v59, %v191
    %193 = vmatprep.mubr.f32.mxu0 0.0
    %194 = vmatmul.mubr.f32.gmra.mrb[0].mxu0 %v73
    %v195 = vpop.f32.mrb[0].mxu0
    %v196 = vadd.f32 %v55, %v195
    %v197 = vpop.f32.mrb[0].mxu0
    %v198 = vadd.f32 %v59, %v197
    %199 = vmatprep.mubr.f32.mxu0 0.0
    %200 = vmatmul.mubr.f32.gmra.mrb[0].mxu0 %v76
    %v201 = vpop.f32.mrb[0].mxu0
    %v202 = vadd.f32 %v55, %v201
    %v203 = vpop.f32.mrb[0].mxu0
    %v204 = vadd.f32 %v59, %v203
    %205 = vmatprep.mubr.f32.mxu0 0.0
    %206 = vmatmul.mubr.f32.gmra.mrb[0].mxu0 %v79
    %v207 = vpop.f32.mrb[0].mxu0
    %v208 = vadd.f32 %v55, %v207
    %v209 = vpop.f32.mrb[0].mxu0
    %v210 = vadd.f32 %v59, %v209
    %211 = vmatprep.mubr.f32.mxu0 0.0
    %212 = vmatmul.mubr.f32.gmra.mrb[0].mxu0 %v82
    %v213 = vpop.f32.mrb[0].mxu0
    %v214 = vadd.f32 %v55, %v213
    %v215 = vpop.f32.mrb[0].mxu0
    %v216 = vadd.f32 %v59, %v215
    %217 = vmatprep.mubr.f32.mxu0 0.0
    %218 = vmatmul.mubr.f32.gmra.mrb[0].mxu0 %v85
    %v219 = vpop.f32.mrb[0].mxu0
    %v220 = vadd.f32 %v55, %v219
    %v221 = vpop.f32.mrb[0].mxu0
    %v222 = vadd.f32 %v59, %v221
    %223 = vmatprep.mubr.f32.mxu0 0.0
    %224 = vmatmul.mubr.f32.gmra.mrb[0].mxu0 %v88
    %v225 = vpop.f32.mrb[0].mxu0
    %v226 = vadd.f32 %v55, %v225
    %v227 = vpop.f32.mrb[0].mxu0
    %v228 = vadd.f32 %v59, %v227
    %229 = vmatprep.mubr.f32.mxu0 0.0
    %230 = vmatmul.mubr.f32.gmra.mrb[0].mxu0 %v91
    %v231 = vpop.f32.mrb[0].mxu0
    %v232 = vadd.f32 %v55, %v231
    %v233 = vpop.f32.mrb[0].mxu0
    %v234 = vadd.f32 %v59, %v233
    %235 = vmatprep.mubr.f32.mxu0 0.0
    %236 = vmatmul.mubr.f32.gmra.mrb[0].mxu0 %v94
    %v237 = vpop.f32.mrb[0].mxu0
    %v238 = vadd.f32 %v55, %v237
    %v239 = vpop.f32.mrb[0].mxu0
    %v240 = vadd.f32 %v59, %v239
    %241 = vmatprep.mubr.f32.mxu0 0.0
    %242 = vmatmul.mubr.f32.gmra.mrb[0].mxu0 %v97
    %v243 = vpop.f32.mrb[0].mxu0
    %v244 = vadd.f32 %v55, %v243
    %v245 = vpop.f32.mrb[0].mxu0
    %v246 = vadd.f32 %v59, %v245
    %247 = vmatprep.mubr.f32.mxu0 0.0
    %248 = vmatmul.mubr.f32.gmra.mrb[0].mxu0 %v100
    %v249 = vpop.f32.mrb[0].mxu0
    %v250 = vadd.f32 %v55, %v249
    %v251 = vpop.f32.mrb[0].mxu0
    %v252 = vadd.f32 %v59, %v251
    %253 = vmatprep.mubr.f32.mxu0 0.0
    %254 = vmatmul.mubr.f32.gmra.mrb[0].mxu0 %v103
    %v255 = vpop.f32.mrb[0].mxu0
    %v256 = vadd.f32 %v55, %v255
    %v257 = vpop.f32.mrb[0].mxu0
    %v258 = vadd.f32 %v59, %v257
    %259 = vmatprep.mubr.f32.mxu0 0.0
    %260 = vmatmul.mubr.f32.gmra.mrb[0].mxu0 %v106
    %v261 = vpop.f32.mrb[0].mxu0
    %v262 = vadd.f32 %v55, %v261
    %v263 = vpop.f32.mrb[0].mxu0
    %v264 = vadd.f32 %v59, %v263
    %265 = vmatprep.mubr.f32.mxu0 0.0
    %266 = vmatmul.mubr.f32.gmra.mrb[0].mxu0 %v109
    %v267 = vpop.f32.mrb[0].mxu0
    %v268 = vadd.f32 %v55, %v267
    %v269 = vpop.f32.mrb[0].mxu0
    %v270 = vadd.f32 %v59, %v269
    %271 = vdwg.mxu0
    %v272 = vld [vmem:[%s2] sm:$0xff]
    %v273 = vld [vmem:[%s2 + $0x8] sm:$0xff]
    %v274 = vld [vmem:[%s2 + $0x10] sm:$0xff]
    %v275 = vld [vmem:[%s2 + $0x18] sm:$0xff]
    %276 = vmatprep.subr.mxu0 %v273
    %277 = vmatpush1.msra.mxu0 %v272
    %278 = vmatprep.subr.mxu0 %v275
    %279 = vmatpush1.msra.mxu0 %v274
    %280 = vmatprep.subr.mxu0 0.0
    %281 = vmatpush1.msra.mxu0 0.0
    %282 = vmatprep.subr.mxu0 0.0
    %283 = vmatpush1.msra.mxu0 0.0
    %284 = vmatprep.subr.mxu0 0.0
    %285 = vmatpush1.msra.mxu0 0.0
    %286 = vmatprep.subr.mxu0 0.0
    %287 = vmatpush1.msra.mxu0 0.0
    %288 = vmatprep.subr.mxu0 0.0
    %289 = vmatpush1.msra.mxu0 0.0
    %290 = vmatprep.subr.mxu0 0.0
    %291 = vmatpush1.msra.mxu0 0.0
    %292 = vmatprep.subr.mxu0 0.0
    %293 = vmatpush1.msra.mxu0 0.0
    %294 = vmatprep.subr.mxu0 0.0
    %295 = vmatpush1.msra.mxu0 0.0
    %296 = vmatprep.subr.mxu0 0.0
    %297 = vmatpush1.msra.mxu0 0.0
    %298 = vmatprep.subr.mxu0 0.0
    %299 = vmatpush1.msra.mxu0 0.0
    %300 = vmatprep.subr.mxu0 0.0
    %301 = vmatpush1.msra.mxu0 0.0
    %302 = vmatprep.subr.mxu0 0.0
    %303 = vmatpush1.msra.mxu0 0.0
    %304 = vmatprep.subr.mxu0 0.0
    %305 = vmatpush1.msra.mxu0 0.0
    %306 = vmatprep.subr.mxu0 0.0
    %307 = vmatpush1.msra.mxu0 0.0
    %308 = vmatprep.subr.mxu0 0.0
    %309 = vmatpush1.msra.mxu0 0.0
    %310 = vmatprep.subr.mxu0 0.0
    %311 = vmatpush1.msra.mxu0 0.0
    %312 = vmatprep.subr.mxu0 0.0
    %313 = vmatpush1.msra.mxu0 0.0
    %314 = vmatprep.subr.mxu0 0.0
    %315 = vmatpush1.msra.mxu0 0.0
    %316 = vmatprep.subr.mxu0 0.0
    %317 = vmatpush1.msra.mxu0 0.0
    %318 = vmatprep.subr.mxu0 0.0
    %319 = vmatpush1.msra.mxu0 0.0
    %320 = vmatprep.subr.mxu0 0.0
    %321 = vmatpush1.msra.mxu0 0.0
    %322 = vmatprep.subr.mxu0 0.0
    %323 = vmatpush1.msra.mxu0 0.0
    %324 = vmatprep.subr.mxu0 0.0
    %325 = vmatpush1.msra.mxu0 0.0
    %326 = vmatprep.subr.mxu0 0.0
    %327 = vmatpush1.msra.mxu0 0.0
    %328 = vmatprep.subr.mxu0 0.0
    %329 = vmatpush1.msra.mxu0 0.0
    %330 = vmatprep.subr.mxu0 0.0
    %331 = vmatpush1.msra.mxu0 0.0
    %332 = vmatprep.subr.mxu0 0.0
    %333 = vmatpush1.msra.mxu0 0.0
    %334 = vmatprep.subr.mxu0 0.0
    %335 = vmatpush1.msra.mxu0 0.0
    %336 = vmatprep.subr.mxu0 0.0
    %337 = vmatpush1.msra.mxu0 0.0
    %338 = vmatprep.subr.mxu0 0.0
    %339 = vmatpush1.msra.mxu0 0.0
    %340 = vmatprep.mubr.f32.mxu0 0.0
    %341 = vmatmul.mubr.f32.gmra.mrb[0].mxu0 %v64
    %v342 = vpop.f32.mrb[0].mxu0
    %v343 = vadd.f32 %v55, %v342
    %v344 = vpop.f32.mrb[0].mxu0
    %v345 = vadd.f32 %v59, %v344
    %346 = vmatprep.mubr.f32.mxu0 0.0
    %347 = vmatmul.mubr.f32.gmra.mrb[0].mxu0 %v67
    %v348 = vpop.f32.mrb[0].mxu0
    %v349 = vadd.f32 %v55, %v348
    %v350 = vpop.f32.mrb[0].mxu0
    %v351 = vadd.f32 %v59, %v350
    %352 = vmatprep.mubr.f32.mxu0 0.0
    %353 = vmatmul.mubr.f32.gmra.mrb[0].mxu0 %v70
    %v354 = vpop.f32.mrb[0].mxu0
    %v355 = vadd.f32 %v55, %v354
    %v356 = vpop.f32.mrb[0].mxu0
    %v357 = vadd.f32 %v59, %v356
    %358 = vmatprep.mubr.f32.mxu0 0.0
    %359 = vmatmul.mubr.f32.gmra.mrb[0].mxu0 %v73
    %v360 = vpop.f32.mrb[0].mxu0
    %v361 = vadd.f32 %v55, %v360
    %v362 = vpop.f32.mrb[0].mxu0
    %v363 = vadd.f32 %v59, %v362
    %364 = vmatprep.mubr.f32.mxu0 0.0
    %365 = vmatmul.mubr.f32.gmra.mrb[0].mxu0 %v76
    %v366 = vpop.f32.mrb[0].mxu0
    %v367 = vadd.f32 %v55, %v366
    %v368 = vpop.f32.mrb[0].mxu0
    %v369 = vadd.f32 %v59, %v368
    %370 = vmatprep.mubr.f32.mxu0 0.0
    %371 = vmatmul.mubr.f32.gmra.mrb[0].mxu0 %v79
    %v372 = vpop.f32.mrb[0].mxu0
    %v373 = vadd.f32 %v55, %v372
    %v374 = vpop.f32.mrb[0].mxu0
    %v375 = vadd.f32 %v59, %v374
    %376 = vmatprep.mubr.f32.mxu0 0.0
    %377 = vmatmul.mubr.f32.gmra.mrb[0].mxu0 %v82
    %v378 = vpop.f32.mrb[0].mxu0
    %v379 = vadd.f32 %v55, %v378
    %v380 = vpop.f32.mrb[0].mxu0
    %v381 = vadd.f32 %v59, %v380
    %382 = vmatprep.mubr.f32.mxu0 0.0
    %383 = vmatmul.mubr.f32.gmra.mrb[0].mxu0 %v85
    %v384 = vpop.f32.mrb[0].mxu0
    %v385 = vadd.f32 %v55, %v384
    %v386 = vpop.f32.mrb[0].mxu0
    %v387 = vadd.f32 %v59, %v386
    %388 = vmatprep.mubr.f32.mxu0 0.0
    %389 = vmatmul.mubr.f32.gmra.mrb[0].mxu0 %v88
    %v390 = vpop.f32.mrb[0].mxu0
    %v391 = vadd.f32 %v55, %v390
    %v392 = vpop.f32.mrb[0].mxu0
    %v393 = vadd.f32 %v59, %v392
    %394 = vmatprep.mubr.f32.mxu0 0.0
    %395 = vmatmul.mubr.f32.gmra.mrb[0].mxu0 %v91
    %v396 = vpop.f32.mrb[0].mxu0
    %v397 = vadd.f32 %v55, %v396
    %v398 = vpop.f32.mrb[0].mxu0
    %v399 = vadd.f32 %v59, %v398
    %400 = vmatprep.mubr.f32.mxu0 0.0
    %401 = vmatmul.mubr.f32.gmra.mrb[0].mxu0 %v94
    %v402 = vpop.f32.mrb[0].mxu0
    %v403 = vadd.f32 %v55, %v402
    %v404 = vpop.f32.mrb[0].mxu0
    %v405 = vadd.f32 %v59, %v404
    %406 = vmatprep.mubr.f32.mxu0 0.0
    %407 = vmatmul.mubr.f32.gmra.mrb[0].mxu0 %v97
    %v408 = vpop.f32.mrb[0].mxu0
    %v409 = vadd.f32 %v55, %v408
    %v410 = vpop.f32.mrb[0].mxu0
    %v411 = vadd.f32 %v59, %v410
    %412 = vmatprep.mubr.f32.mxu0 0.0
    %413 = vmatmul.mubr.f32.gmra.mrb[0].mxu0 %v100
    %v414 = vpop.f32.mrb[0].mxu0
    %v415 = vadd.f32 %v55, %v414
    %v416 = vpop.f32.mrb[0].mxu0
    %v417 = vadd.f32 %v59, %v416
    %418 = vmatprep.mubr.f32.mxu0 0.0
    %419 = vmatmul.mubr.f32.gmra.mrb[0].mxu0 %v103
    %v420 = vpop.f32.mrb[0].mxu0
    %v421 = vadd.f32 %v55, %v420
    %v422 = vpop.f32.mrb[0].mxu0
    %v423 = vadd.f32 %v59, %v422
    %424 = vmatprep.mubr.f32.mxu0 0.0
    %425 = vmatmul.mubr.f32.gmra.mrb[0].mxu0 %v106
    %v426 = vpop.f32.mrb[0].mxu0
    %v427 = vadd.f32 %v55, %v426
    %v428 = vpop.f32.mrb[0].mxu0
    %v429 = vadd.f32 %v59, %v428
    %430 = vmatprep.mubr.f32.mxu0 0.0
    %431 = vmatmul.mubr.f32.gmra.mrb[0].mxu0 %v109
    %v432 = vpop.f32.mrb[0].mxu0
    %v433 = vadd.f32 %v55, %v432
    %v434 = vpop.f32.mrb[0].mxu0
    %v435 = vadd.f32 %v59, %v434
    %436 = vdwg.mxu0
    %v437 = vmax.f32 %v178, %v343
    %v438 = vmax.f32 %v180, %v345
    %v439 = vmax.f32 %v184, %v349
    %v440 = vmax.f32 %v186, %v351
    %v441 = vmax.f32 %v190, %v355
    %v442 = vmax.f32 %v192, %v357
    %v443 = vmax.f32 %v196, %v361
    %v444 = vmax.f32 %v198, %v363
    %v445 = vmax.f32 %v202, %v367
    %v446 = vmax.f32 %v204, %v369
    %v447 = vmax.f32 %v208, %v373
    %v448 = vmax.f32 %v210, %v375
    %v449 = vmax.f32 %v214, %v379
    %v450 = vmax.f32 %v216, %v381
    %v451 = vmax.f32 %v220, %v385
    %v452 = vmax.f32 %v222, %v387
    %v453 = vmax.f32 %v226, %v391
    %v454 = vmax.f32 %v228, %v393
    %v455 = vmax.f32 %v232, %v397
    %v456 = vmax.f32 %v234, %v399
    %v457 = vmax.f32 %v238, %v403
    %v458 = vmax.f32 %v240, %v405
    %v459 = vmax.f32 %v244, %v409
    %v460 = vmax.f32 %v246, %v411
    %v461 = vmax.f32 %v250, %v415
    %v462 = vmax.f32 %v252, %v417
    %v463 = vmax.f32 %v256, %v421
    %v464 = vmax.f32 %v258, %v423
    %v465 = vmax.f32 %v262, %v427
    %v466 = vmax.f32 %v264, %v429
    %v467 = vmax.f32 %v268, %v433
    %v468 = vmax.f32 %v270, %v435
    %v469 = vmax.f32 %v437, 0.0
    %v470 = vmax.f32 %v438, 0.0
    %v471 = vmax.f32 %v439, 0.0
    %v472 = vmax.f32 %v440, 0.0
    %v473 = vmax.f32 %v441, 0.0
    %v474 = vmax.f32 %v442, 0.0
    %v475 = vmax.f32 %v443, 0.0
    %v476 = vmax.f32 %v444, 0.0
    %v477 = vmax.f32 %v445, 0.0
    %v478 = vmax.f32 %v446, 0.0
    %v479 = vmax.f32 %v447, 0.0
    %v480 = vmax.f32 %v448, 0.0
    %v481 = vmax.f32 %v449, 0.0
    %v482 = vmax.f32 %v450, 0.0
    %v483 = vmax.f32 %v451, 0.0
    %v484 = vmax.f32 %v452, 0.0
    %v485 = vmax.f32 %v453, 0.0
    %v486 = vmax.f32 %v454, 0.0
    %v487 = vmax.f32 %v455, 0.0
    %v488 = vmax.f32 %v456, 0.0
    %v489 = vmax.f32 %v457, 0.0
    %v490 = vmax.f32 %v458, 0.0
    %v491 = vmax.f32 %v459, 0.0
    %v492 = vmax.f32 %v460, 0.0
    %v493 = vmax.f32 %v461, 0.0
    %v494 = vmax.f32 %v462, 0.0
    %v495 = vmax.f32 %v463, 0.0
    %v496 = vmax.f32 %v464, 0.0
    %v497 = vmax.f32 %v465, 0.0
    %v498 = vmax.f32 %v466, 0.0
    %v499 = vmax.f32 %v467, 0.0
    %v500 = vmax.f32 %v468, 0.0
    %v501 = vld [vmem:[%s4] sm:$0xff]
    %v502 = vld [vmem:[%s4 + $0x8] sm:$0xff]
    %v503 = vld [vmem:[%s4 + $0x10] sm:$0xff]
    %v504 = vld [vmem:[%s4 + $0x18] sm:$0xff]
    %v505 = vld [vmem:[%s4 + $0x20] sm:$0xff]
    %v506 = vld [vmem:[%s4 + $0x28] sm:$0xff]
    %v507 = vld [vmem:[%s4 + $0x30] sm:$0xff]
    %v508 = vld [vmem:[%s4 + $0x38] sm:$0xff]
    %v509 = vld [vmem:[%s4 + $0x40] sm:$0xff]
    %v510 = vld [vmem:[%s4 + $0x48] sm:$0xff]
    %v511 = vld [vmem:[%s4 + $0x50] sm:$0xff]
    %v512 = vld [vmem:[%s4 + $0x58] sm:$0xff]
    %v513 = vld [vmem:[%s4 + $0x60] sm:$0xff]
    %v514 = vld [vmem:[%s4 + $0x68] sm:$0xff]
    %v515 = vld [vmem:[%s4 + $0x70] sm:$0xff]
    %v516 = vld [vmem:[%s4 + $0x78] sm:$0xff]
    %v517 = vld [vmem:[%s4 + $0x80] sm:$0xff]
    %v518 = vld [vmem:[%s4 + $0x88] sm:$0xff]
    %v519 = vld [vmem:[%s4 + $0x90] sm:$0xff]
    %v520 = vld [vmem:[%s4 + $0x98] sm:$0xff]
    %v521 = vld [vmem:[%s4 + $0xa0] sm:$0xff]
    %v522 = vld [vmem:[%s4 + $0xa8] sm:$0xff]
    %v523 = vld [vmem:[%s4 + $0xb0] sm:$0xff]
    %v524 = vld [vmem:[%s4 + $0xb8] sm:$0xff]
    %v525 = vld [vmem:[%s4 + $0xc0] sm:$0xff]
    %v526 = vld [vmem:[%s4 + $0xc8] sm:$0xff]
    %v527 = vld [vmem:[%s4 + $0xd0] sm:$0xff]
    %v528 = vld [vmem:[%s4 + $0xd8] sm:$0xff]
    %v529 = vld [vmem:[%s4 + $0xe0] sm:$0xff]
    %v530 = vld [vmem:[%s4 + $0xe8] sm:$0xff]
    %v531 = vld [vmem:[%s4 + $0xf0] sm:$0xff]
    %v532 = vld [vmem:[%s4 + $0xf8] sm:$0xff]
    %v533 = vld [vmem:[%s5] sm:$0x1]
    %v535 = vlaneseq
    %v536 = vshrl.u32 %v535, 7
    %v537 = vsub.s32 0, %v536
    %v538 = vrot.slane %v533, %v537
    %540 = vmatprep.subr.mxu0 0.0
    %541 = vmatpush1.msra.mxu0 %v501
    %542 = vmatprep.subr.mxu0 0.0
    %543 = vmatpush1.msra.mxu0 %v502
    %544 = vmatprep.subr.mxu0 0.0
    %545 = vmatpush1.msra.mxu0 %v503
    %546 = vmatprep.subr.mxu0 0.0
    %547 = vmatpush1.msra.mxu0 %v504
    %548 = vmatprep.subr.mxu0 0.0
    %549 = vmatpush1.msra.mxu0 %v505
    %550 = vmatprep.subr.mxu0 0.0
    %551 = vmatpush1.msra.mxu0 %v506
    %552 = vmatprep.subr.mxu0 0.0
    %553 = vmatpush1.msra.mxu0 %v507
    %554 = vmatprep.subr.mxu0 0.0
    %555 = vmatpush1.msra.mxu0 %v508
    %556 = vmatprep.subr.mxu0 0.0
    %557 = vmatpush1.msra.mxu0 %v509
    %558 = vmatprep.subr.mxu0 0.0
    %559 = vmatpush1.msra.mxu0 %v510
    %560 = vmatprep.subr.mxu0 0.0
    %561 = vmatpush1.msra.mxu0 %v511
    %562 = vmatprep.subr.mxu0 0.0
    %563 = vmatpush1.msra.mxu0 %v512
    %564 = vmatprep.subr.mxu0 0.0
    %565 = vmatpush1.msra.mxu0 %v513
    %566 = vmatprep.subr.mxu0 0.0
    %567 = vmatpush1.msra.mxu0 %v514
    %568 = vmatprep.subr.mxu0 0.0
    %569 = vmatpush1.msra.mxu0 %v515
    %570 = vmatprep.subr.mxu0 0.0
    %571 = vmatpush1.msra.mxu0 %v516
    %572 = vmatprep.subr.mxu0 0.0
    %573 = vmatpush1.msra.mxu0 %v517
    %574 = vmatprep.subr.mxu0 0.0
    %575 = vmatpush1.msra.mxu0 %v518
    %576 = vmatprep.subr.mxu0 0.0
    %577 = vmatpush1.msra.mxu0 %v519
    %578 = vmatprep.subr.mxu0 0.0
    %579 = vmatpush1.msra.mxu0 %v520
    %580 = vmatprep.subr.mxu0 0.0
    %581 = vmatpush1.msra.mxu0 %v521
    %582 = vmatprep.subr.mxu0 0.0
    %583 = vmatpush1.msra.mxu0 %v522
    %584 = vmatprep.subr.mxu0 0.0
    %585 = vmatpush1.msra.mxu0 %v523
    %586 = vmatprep.subr.mxu0 0.0
    %587 = vmatpush1.msra.mxu0 %v524
    %588 = vmatprep.subr.mxu0 0.0
    %589 = vmatpush1.msra.mxu0 %v525
    %590 = vmatprep.subr.mxu0 0.0
    %591 = vmatpush1.msra.mxu0 %v526
    %592 = vmatprep.subr.mxu0 0.0
    %593 = vmatpush1.msra.mxu0 %v527
    %594 = vmatprep.subr.mxu0 0.0
    %595 = vmatpush1.msra.mxu0 %v528
    %596 = vmatprep.subr.mxu0 0.0
    %597 = vmatpush1.msra.mxu0 %v529
    %598 = vmatprep.subr.mxu0 0.0
    %599 = vmatpush1.msra.mxu0 %v530
    %600 = vmatprep.subr.mxu0 0.0
    %601 = vmatpush1.msra.mxu0 %v531
    %602 = vmatprep.subr.mxu0 0.0
    %603 = vmatpush1.msra.mxu0 %v532
    %604 = vmatprep.mubr.f32.mxu0 %v470
    %605 = vmatmul.mubr.f32.gmra.mrb[0].mxu0 %v469
    %v606 = vpop.f32.mrb[0].mxu0
    %v607 = vadd.f32 %v538, %v606
    %v608 = vpop.f32.mrb[0].mxu0
    %609 = vmatprep.mubr.f32.mxu0 %v472
    %610 = vmatmul.mubr.f32.gmra.mrb[0].mxu0 %v471
    %v611 = vpop.f32.mrb[0].mxu0
    %v612 = vadd.f32 %v538, %v611
    %v613 = vpop.f32.mrb[0].mxu0
    %614 = vmatprep.mubr.f32.mxu0 %v474
    %615 = vmatmul.mubr.f32.gmra.mrb[0].mxu0 %v473
    %v616 = vpop.f32.mrb[0].mxu0
    %v617 = vadd.f32 %v538, %v616
    %v618 = vpop.f32.mrb[0].mxu0
    %619 = vmatprep.mubr.f32.mxu0 %v476
    %620 = vmatmul.mubr.f32.gmra.mrb[0].mxu0 %v475
    %v621 = vpop.f32.mrb[0].mxu0
    %v622 = vadd.f32 %v538, %v621
    %v623 = vpop.f32.mrb[0].mxu0
    %624 = vmatprep.mubr.f32.mxu0 %v478
    %625 = vmatmul.mubr.f32.gmra.mrb[0].mxu0 %v477
    %v626 = vpop.f32.mrb[0].mxu0
    %v627 = vadd.f32 %v538, %v626
    %v628 = vpop.f32.mrb[0].mxu0
    %629 = vmatprep.mubr.f32.mxu0 %v480
    %630 = vmatmul.mubr.f32.gmra.mrb[0].mxu0 %v479
    %v631 = vpop.f32.mrb[0].mxu0
    %v632 = vadd.f32 %v538, %v631
    %v633 = vpop.f32.mrb[0].mxu0
    %634 = vmatprep.mubr.f32.mxu0 %v482
    %635 = vmatmul.mubr.f32.gmra.mrb[0].mxu0 %v481
    %v636 = vpop.f32.mrb[0].mxu0
    %v637 = vadd.f32 %v538, %v636
    %v638 = vpop.f32.mrb[0].mxu0
    %639 = vmatprep.mubr.f32.mxu0 %v484
    %640 = vmatmul.mubr.f32.gmra.mrb[0].mxu0 %v483
    %v641 = vpop.f32.mrb[0].mxu0
    %v642 = vadd.f32 %v538, %v641
    %v643 = vpop.f32.mrb[0].mxu0
    %644 = vmatprep.mubr.f32.mxu0 %v486
    %645 = vmatmul.mubr.f32.gmra.mrb[0].mxu0 %v485
    %v646 = vpop.f32.mrb[0].mxu0
    %v647 = vadd.f32 %v538, %v646
    %v648 = vpop.f32.mrb[0].mxu0
    %649 = vmatprep.mubr.f32.mxu0 %v488
    %650 = vmatmul.mubr.f32.gmra.mrb[0].mxu0 %v487
    %v651 = vpop.f32.mrb[0].mxu0
    %v652 = vadd.f32 %v538, %v651
    %v653 = vpop.f32.mrb[0].mxu0
    %654 = vmatprep.mubr.f32.mxu0 %v490
    %655 = vmatmul.mubr.f32.gmra.mrb[0].mxu0 %v489
    %v656 = vpop.f32.mrb[0].mxu0
    %v657 = vadd.f32 %v538, %v656
    %v658 = vpop.f32.mrb[0].mxu0
    %659 = vmatprep.mubr.f32.mxu0 %v492
    %660 = vmatmul.mubr.f32.gmra.mrb[0].mxu0 %v491
    %v661 = vpop.f32.mrb[0].mxu0
    %v662 = vadd.f32 %v538, %v661
    %v663 = vpop.f32.mrb[0].mxu0
    %664 = vmatprep.mubr.f32.mxu0 %v494
    %665 = vmatmul.mubr.f32.gmra.mrb[0].mxu0 %v493
    %v666 = vpop.f32.mrb[0].mxu0
    %v667 = vadd.f32 %v538, %v666
    %v668 = vpop.f32.mrb[0].mxu0
    %669 = vmatprep.mubr.f32.mxu0 %v496
    %670 = vmatmul.mubr.f32.gmra.mrb[0].mxu0 %v495
    %v671 = vpop.f32.mrb[0].mxu0
    %v672 = vadd.f32 %v538, %v671
    %v673 = vpop.f32.mrb[0].mxu0
    %674 = vmatprep.mubr.f32.mxu0 %v498
    %675 = vmatmul.mubr.f32.gmra.mrb[0].mxu0 %v497
    %v676 = vpop.f32.mrb[0].mxu0
    %v677 = vadd.f32 %v538, %v676
    %v678 = vpop.f32.mrb[0].mxu0
    %679 = vmatprep.mubr.f32.mxu0 %v500
    %680 = vmatmul.mubr.f32.gmra.mrb[0].mxu0 %v499
    %v681 = vpop.f32.mrb[0].mxu0
    %v682 = vadd.f32 %v538, %v681
    %v683 = vpop.f32.mrb[0].mxu0
    %684 = vdwg.mxu0
    %v685 = vmax.f32 %v607, 0.0
    %v686 = vmax.f32 %v612, 0.0
    %v687 = vmax.f32 %v617, 0.0
    %v688 = vmax.f32 %v622, 0.0
    %v689 = vmax.f32 %v627, 0.0
    %v690 = vmax.f32 %v632, 0.0
    %v691 = vmax.f32 %v637, 0.0
    %v692 = vmax.f32 %v642, 0.0
    %v693 = vmax.f32 %v647, 0.0
    %v694 = vmax.f32 %v652, 0.0
    %v695 = vmax.f32 %v657, 0.0
    %v696 = vmax.f32 %v662, 0.0
    %v697 = vmax.f32 %v667, 0.0
    %v698 = vmax.f32 %v672, 0.0
    %v699 = vmax.f32 %v677, 0.0
    %v700 = vmax.f32 %v682, 0.0
    %v701 = vld [vmem:[%s6] sm:$0x3]
    %v702 = vld [vmem:[%s7] sm:$0x3]
    %704 = vset.pattern.permute.xlu0 0
    %705 = vperm.xlu0 %704, %v702
    %v706 = vpop.permute.xlu0 %705
    %vm708 = vcmask 261120
    %v710 = vsel %vm708, %v701, 0
    %v713 = vsel %vm708, %v685, 0
    %v716 = vsel %vm708, %v686, 0
    %v719 = vsel %vm708, %v687, 0
    %v722 = vsel %vm708, %v688, 0
    %v725 = vsel %vm708, %v689, 0
    %v728 = vsel %vm708, %v690, 0
    %v731 = vsel %vm708, %v691, 0
    %v734 = vsel %vm708, %v692, 0
    %v737 = vsel %vm708, %v693, 0
    %v740 = vsel %vm708, %v694, 0
    %v743 = vsel %vm708, %v695, 0
    %v746 = vsel %vm708, %v696, 0
    %v749 = vsel %vm708, %v697, 0
    %v752 = vsel %vm708, %v698, 0
    %v755 = vsel %vm708, %v699, 0
    %v758 = vsel %vm708, %v700, 0
    %760 = vmatprep.subr.mxu0 0.0
    %761 = vmatpush1.xpose.msra.mxu0 %v713
    %762 = vmatprep.subr.mxu0 0.0
    %763 = vmatpush1.xpose.msra.mxu0 %v716
    %764 = vmatprep.subr.mxu0 0.0
    %765 = vmatpush1.xpose.msra.mxu0 %v719
    %766 = vmatprep.subr.mxu0 0.0
    %767 = vmatpush1.xpose.msra.mxu0 %v722
    %768 = vmatprep.subr.mxu0 0.0
    %769 = vmatpush1.xpose.msra.mxu0 %v725
    %770 = vmatprep.subr.mxu0 0.0
    %771 = vmatpush1.xpose.msra.mxu0 %v728
    %772 = vmatprep.subr.mxu0 0.0
    %773 = vmatpush1.xpose.msra.mxu0 %v731
    %774 = vmatprep.subr.mxu0 0.0
    %775 = vmatpush1.xpose.msra.mxu0 %v734
    %776 = vmatprep.subr.mxu0 0.0
    %777 = vmatpush1.xpose.msra.mxu0 %v737
    %778 = vmatprep.subr.mxu0 0.0
    %779 = vmatpush1.xpose.msra.mxu0 %v740
    %780 = vmatprep.subr.mxu0 0.0
    %781 = vmatpush1.xpose.msra.mxu0 %v743
    %782 = vmatprep.subr.mxu0 0.0
    %783 = vmatpush1.xpose.msra.mxu0 %v746
    %784 = vmatprep.subr.mxu0 0.0
    %785 = vmatpush1.xpose.msra.mxu0 %v749
    %786 = vmatprep.subr.mxu0 0.0
    %787 = vmatpush1.xpose.msra.mxu0 %v752
    %788 = vmatprep.subr.mxu0 0.0
    %789 = vmatpush1.xpose.msra.mxu0 %v755
    %790 = vmatprep.subr.mxu0 0.0
    %791 = vmatpush1.xpose.msra.mxu0 %v758
    %792 = vmatprep.subr.mxu0 0.0
    %793 = vmatpush1.xpose.msra.mxu0 0.0
    %794 = vmatprep.subr.mxu0 0.0
    %795 = vmatpush1.xpose.msra.mxu0 0.0
    %796 = vmatprep.subr.mxu0 0.0
    %797 = vmatpush1.xpose.msra.mxu0 0.0
    %798 = vmatprep.subr.mxu0 0.0
    %799 = vmatpush1.xpose.msra.mxu0 0.0
    %800 = vmatprep.subr.mxu0 0.0
    %801 = vmatpush1.xpose.msra.mxu0 0.0
    %802 = vmatprep.subr.mxu0 0.0
    %803 = vmatpush1.xpose.msra.mxu0 0.0
    %804 = vmatprep.subr.mxu0 0.0
    %805 = vmatpush1.xpose.msra.mxu0 0.0
    %806 = vmatprep.subr.mxu0 0.0
    %807 = vmatpush1.xpose.msra.mxu0 0.0
    %808 = vmatprep.subr.mxu0 0.0
    %809 = vmatpush1.xpose.msra.mxu0 0.0
    %810 = vmatprep.subr.mxu0 0.0
    %811 = vmatpush1.xpose.msra.mxu0 0.0
    %812 = vmatprep.subr.mxu0 0.0
    %813 = vmatpush1.xpose.msra.mxu0 0.0
    %814 = vmatprep.subr.mxu0 0.0
    %815 = vmatpush1.xpose.msra.mxu0 0.0
    %816 = vmatprep.subr.mxu0 0.0
    %817 = vmatpush1.xpose.msra.mxu0 0.0
    %818 = vmatprep.subr.mxu0 0.0
    %819 = vmatpush1.xpose.msra.mxu0 0.0
    %820 = vmatprep.subr.mxu0 0.0
    %821 = vmatpush1.xpose.msra.mxu0 0.0
    %822 = vmatprep.subr.mxu0 0.0
    %823 = vmatpush1.xpose.msra.mxu0 0.0
    %824 = vmatprep.mubr.f32.mxu0 0.0
    %825 = vmatmul.mubr.f32.gmra.mrb[0].mxu0 %v710
    %v826 = vpop.f32.mrb[0].mxu0
    %v827 = vadd.f32 %v706, %v826
    %v828 = vpop.f32.mrb[0].mxu0
    %829 = vdwg.mxu0
    %830 = vst [vmem:[#allocation2] sm:$0x3] %v827
    // Predicated region
    $region34: #{tpu_custom_call.1} parent=1 // pred_check
      _
    $region35: #{tpu_custom_call.1} parent=1 // pred_check_branch
      %832 = sbr.rel (0) target = $region37
    $region36: #{tpu_custom_call.1} parent=1 // pred_region
      %s834 = ssub.s32 32, 32
      %835 = vsyncadd [#allocation3], %s834
      %s837 = sshll.u32 [#allocation2], 4
      %s838 = int_to_ptr.vmem [resolvable:$true] %s837
      %840 = dma.vmem_to_hbm [thread:$0]  %s838, 32, %s8, [#allocation3]
    $region37: #{tpu_custom_call.1} parent=1 // pred_fallthru
      _
    // Predicated region
    $region38: #{tpu_custom_call.1} parent=1 // pred_check
      _
    $region39: #{tpu_custom_call.1} parent=1 // pred_check_branch
      %842 = sbr.rel (0) target = $region41
    $region40: #{tpu_custom_call.1} parent=1 // pred_region
      %843 = dma.done [#allocation3], 32
    $region41: #{tpu_custom_call.1} parent=1 // pred_fallthru
      _
    %844 = vsyncpa [#allocation3], 1

</llo_original>
